<compile_context>
chip_gen: v6e
topology: v6e:2x2x1
jax: 0.10.0
libtpu: 0.0.40
codegen_flags: <defaults>
</compile_context>

<pallas_src>
import functools

import jax
import jax.numpy as jnp
from jax import lax
from jax.experimental import pallas as pl
from jax.experimental.pallas import tpu as pltpu


def _round_up(n, m):
    return (n + m - 1) // m * m


def _vq_kernel(xt_ref, emb_ref, esq_ref, xqt_ref, idx_ref, sse_ref, run_min_ref,
               *, n_valid):
    """Grid = (row tiles ["parallel"], codebook blocks ["arbitrary", innermost]).

    xt_ref      : (D, tm)   x^T tile (resident across the codebook axis)
    emb_ref     : (bk, D)   -2 * E codebook block (native dtype)
    esq_ref     : (bk, 1)   ||E||^2 block (f32, +1e30 on pad rows)
    xqt_ref     : (D, tm)   x_q^T tile, select-updated across codebook blocks
    idx_ref     : (1,1,tm)  running argmin (lane-dense int32)
    sse_ref     : (1,1,1)   per-row-tile sum of squared errors (written on last block)
    run_min_ref : (1,tm)    f32 scratch, running min distance
    """
    i = pl.program_id(0)
    k = pl.program_id(1)
    nk = pl.num_programs(1)

    xt = xt_ref[...]                     # (D, tm)
    e_m2 = emb_ref[...]                  # (bk, D), holds -2*E
    if xt.dtype != e_m2.dtype:           # static fallback; normally both native dtype
        xt = xt.astype(jnp.float32)
        e_m2 = e_m2.astype(jnp.float32)
    d_dim, tm = xt.shape
    bk = e_m2.shape[0]

    @pl.when(k == 0)
    def _():
        run_min_ref[...] = jnp.full_like(run_min_ref, jnp.inf)

    # Distances for this block, transposed: d[kk, m] = ||e_kk||^2 - 2<e_kk, x_m>.
    # The -2 is pre-folded into emb_ref; ||E||^2 stays an exact f32 bias add.
    ex = lax.dot_general(e_m2, xt, (((1,), (0,)), ((), ())),
                         preferred_element_type=jnp.float32)        # (bk, tm)
    d = ex + esq_ref[...]                                           # + (bk, 1) broadcast

    # Block-local argmin over the codebook rows (sublane axis); min over tied indices
    # == first occurrence (f32 bookkeeping, exact for bk < 2^24).
    blk_min = jnp.min(d, axis=0, keepdims=True)                     # (1, tm)
    iota_f = lax.broadcasted_iota(jnp.int32, (bk, tm), 0).astype(jnp.float32)
    blk_arg_f = jnp.min(jnp.where(d == blk_min, iota_f, jnp.float32(bk)),
                        axis=0, keepdims=True)                      # (1, tm)

    # Online update of the running (min, argmin); strict < keeps the earlier block on
    # exact cross-block ties (global first occurrence, like torch.argmin).
    run_min = run_min_ref[...]
    won = blk_min < run_min                                         # (1, tm) bool
    run_min_ref[...] = jnp.where(won, blk_min, run_min)
    idx_new = blk_arg_f.astype(jnp.int32) + k * bk
    idx_ref[...] = jnp.where(won.reshape(1, 1, tm),
                             idx_new.reshape(1, 1, tm), idx_ref[...])

    # Gather this block's winning rows via a one-hot matmul, transposed so the
    # (1, tm) winner mask broadcasts over sublanes; undo the -2 with an exact *-0.5.
    onehot = (iota_f == blk_arg_f).astype(e_m2.dtype)               # (bk, tm)
    cand_t = lax.dot_general(e_m2, onehot, (((0,), (0,)), ((), ())),
                             preferred_element_type=jnp.float32)    # (D, tm)
    xq_old = xqt_ref[...].astype(jnp.float32)
    xqt_ref[...] = jnp.where(won, -0.5 * cand_t, xq_old).astype(xqt_ref.dtype)

    # Finalize this row tile: partial SSE for the loss (pad rows masked out).
    @pl.when(k == nk - 1)
    def _():
        diff = xqt_ref[...].astype(jnp.float32) - xt.astype(jnp.float32)
        if n_valid % tm != 0:   # static: only when N was padded to a tile multiple
            col = i * tm + lax.broadcasted_iota(jnp.int32, (1, tm), 1)
            diff = jnp.where(col < n_valid, diff, 0.0)
        sse = jnp.sum(diff * diff, axis=0, keepdims=True)           # (1, tm)
        sse = jnp.sum(sse, axis=1, keepdims=True)                   # (1, 1)
        sse_ref[...] = sse.reshape(1, 1, 1)


def _choose_row_tile(n, tm_req):
    n128 = _round_up(max(n, 1), 128)
    tm = min(_round_up(tm_req, 128), n128)
    if n128 // 128 >= 2:
        # keep at least two row tiles so the second TensorCore (v7x) gets work
        tm = min(tm, _round_up((n128 + 1) // 2, 128))
    return max(tm, 128)


@functools.partial(jax.jit, static_argnames=("tm", "block_k"))
def vq_embedding_forward(x, embedding_weight, *, tm=512, block_k=1024):
    """Returns (x_q, loss, indices) matching VQEmbedding.forward at forward time.

    x:                any shape with total size divisible by embedding_dim
    embedding_weight: (num_embeddings, embedding_dim)
    """
    K, D = embedding_weight.shape
    xf = x.reshape(-1, D)
    N = xf.shape[0]

    tm = _choose_row_tile(N, tm)
    n_pad = _round_up(N, tm)
    num_tiles = n_pad // tm
    if n_pad != N:
        xf = jnp.pad(xf, ((0, n_pad - N), (0, 0)))
    # Token-major layout: lane-dense kernel loads/stores along N even when D < 128.
    xt = xf.T                                                       # (D, n_pad)

    # Codebook blocks along the K grid axis.  -2 folded here (exact power-of-two
    # scale); ||E||^2 is an exact f32 bias.  Pad rows get +1e30 norm so they never win.
    bk = min(_round_up(K, 128), _round_up(block_k, 128))
    k_pad = _round_up(K, bk)
    num_kblk = k_pad // bk
    e_sq = jnp.sum(embedding_weight.astype(jnp.float32) ** 2, axis=1, keepdims=True)
    emb_m2 = embedding_weight * (-2.0)
    if k_pad != K:
        emb_m2 = jnp.pad(emb_m2, ((0, k_pad - K), (0, 0)))
        e_sq = jnp.pad(e_sq, ((0, k_pad - K), (0, 0)), constant_values=1e30)

    kernel = functools.partial(_vq_kernel, n_valid=N)

    # VMEM budget: double-buffered blocks + the (bk, tm) working set, with headroom.
    xi = x.dtype.itemsize
    ei = embedding_weight.dtype.itemsize
    est = (4 * _round_up(D, 8) * _round_up(tm, 128) * xi      # x^T + x_q^T blocks
           + 2 * _round_up(bk, 8) * _round_up(D, 128) * ei    # codebook blocks
           + 2 * _round_up(bk, 8) * 128 * 4                   # ||E||^2 blocks (lane pad)
           + 4 * 8 * _round_up(tm, 128) * 4                   # idx out + run_min scratch
           + 5 * bk * tm * 4                                  # (bk, tm) temporaries
           + 4 * _round_up(D, 8) * tm * 4)                    # (D, tm) temporaries
    vmem_limit = int(min(48 * 2**20, max(32 * 2**20, 2 * est)))

    xqt, idx, sse = pl.pallas_call(
        kernel,
        out_shape=(
            jax.ShapeDtypeStruct((D, n_pad), x.dtype),              # x_q^T
            jax.ShapeDtypeStruct((num_tiles, 1, tm), jnp.int32),    # indices (lane-dense)
            jax.ShapeDtypeStruct((num_tiles, 1, 1), jnp.float32),   # per-tile partial SSE
        ),
        grid_spec=pltpu.PrefetchScalarGridSpec(
            num_scalar_prefetch=0,
            grid=(num_tiles, num_kblk),
            in_specs=[
                pl.BlockSpec((D, tm), lambda i, k: (0, i)),         # x^T tile (resident over k)
                pl.BlockSpec((bk, D), lambda i, k: (k, 0)),         # -2*E block
                pl.BlockSpec((bk, 1), lambda i, k: (k, 0)),         # ||E||^2 block
            ],
            out_specs=(
                pl.BlockSpec((D, tm), lambda i, k: (0, i)),
                pl.BlockSpec((1, 1, tm), lambda i, k: (i, 0, 0)),
                pl.BlockSpec((1, 1, 1), lambda i, k: (i, 0, 0)),
            ),
            scratch_shapes=[pltpu.VMEM((1, tm), jnp.float32)],      # running min distance
        ),
        compiler_params=pltpu.CompilerParams(
            dimension_semantics=("parallel", "arbitrary"),
            vmem_limit_bytes=vmem_limit),
    )(xt, emb_m2, e_sq)

    x_q = xqt.T[:N]
    indices = idx.reshape(-1)[:N, None]
    # loss = mse(x_q.detach(), x) + 0.25*mse(x_q, x.detach()) == 1.25 * mse (forward value)
    loss = 1.25 * jnp.sum(sse) / (N * D)
    # straight-through: x + (x_q - x).detach() == x_q numerically in the forward pass
    return x_q, loss, indices


def _reference(x, emb):
    """Pure-JAX reference of the torch forward (correctness check)."""
    D = emb.shape[1]
    xf = x.reshape(-1, D).astype(jnp.float32)
    e = emb.astype(jnp.float32)
    d = jnp.sum(e ** 2, axis=1) - 2.0 * xf @ e.T
    idx = jnp.argmin(d, axis=1)[:, None].astype(jnp.int32)
    xq = e[idx[:, 0]]
    loss = 1.25 * jnp.mean((xq - xf) ** 2)
    return xq, loss, idx


if __name__ == "__main__":
    num_embeddings = 64
    embedding_dim = 32

    key = jax.random.PRNGKey(0)
    k_x, k_e = jax.random.split(key)

    # Encoder features, channels-last: (B, H, W, D) -> flattened (N, D), N = 128.
    x = jax.random.normal(k_x, (2, 8, 8, embedding_dim), dtype=jnp.float32)
    # nn.Embedding weight with the module's init: uniform(-1/K, 1/K).
    embedding_weight = jax.random.uniform(
        k_e, (num_embeddings, embedding_dim), dtype=jnp.float32,
        minval=-1.0 / num_embeddings, maxval=1.0 / num_embeddings)

    x_q, loss, indices = vq_embedding_forward(x, embedding_weight)
    jax.block_until_ready((x_q, loss, indices))

    xq_ref, loss_ref, idx_ref = _reference(x, embedding_weight)
    assert x_q.shape == (128, embedding_dim) and indices.shape == (128, 1)
    assert indices.dtype == jnp.int32
    assert bool(jnp.all(indices == idx_ref)), "index mismatch vs reference"
    assert bool(jnp.allclose(x_q, xq_ref, atol=1e-5)), "x_q mismatch vs reference"
    assert bool(jnp.allclose(loss, loss_ref, rtol=1e-4, atol=1e-6)), "loss mismatch vs reference"

    # Ragged-N path (N = 35, not a multiple of the row tile): pad rows masked from loss.
    x2 = jax.random.normal(jax.random.PRNGKey(1), (1, 5, 7, embedding_dim), jnp.float32)
    x2_q, loss2, idx2 = vq_embedding_forward(x2, embedding_weight)
    jax.block_until_ready((x2_q, loss2, idx2))
    xq2_ref, loss2_ref, idx2_ref = _reference(x2, embedding_weight)
    assert x2_q.shape == (35, embedding_dim) and idx2.shape == (35, 1)
    assert bool(jnp.all(idx2 == idx2_ref)), "ragged index mismatch vs reference"
    assert bool(jnp.allclose(x2_q, xq2_ref, atol=1e-5)), "ragged x_q mismatch vs reference"
    assert bool(jnp.allclose(loss2, loss2_ref, rtol=1e-4, atol=1e-6)), "ragged loss mismatch"

    # Multi-block codebook path (K spans >1 block): exercises the online K-tiled argmin.
    k3 = 200
    emb3 = jax.random.uniform(jax.random.PRNGKey(2), (k3, embedding_dim), jnp.float32,
                              minval=-1.0 / k3, maxval=1.0 / k3)
    x3_q, loss3, idx3 = vq_embedding_forward(x, emb3, block_k=128)
    jax.block_until_ready((x3_q, loss3, idx3))
    xq3_ref, loss3_ref, idx3_ref = _reference(x, emb3)
    assert bool(jnp.all(idx3 == idx3_ref)), "K-tiled index mismatch vs reference"
    assert bool(jnp.allclose(x3_q, xq3_ref, atol=1e-5)), "K-tiled x_q mismatch vs reference"
    assert bool(jnp.allclose(loss3, loss3_ref, rtol=1e-4, atol=1e-6)), "K-tiled loss mismatch"

    print("KERNEL_OK")
</pallas_src>

<mosaic_0001>
module attributes {stable_mosaic.version = 11 : i64} {
  func.func @_vq_kernel(%arg0: i32, %arg1: i32, %arg2: memref<32x128xf32, #tpu.memory_space<vmem>>, %arg3: memref<128x32xf32, #tpu.memory_space<vmem>>, %arg4: memref<128x1xf32, #tpu.memory_space<vmem>>, %arg5: memref<32x128xf32, #tpu.memory_space<vmem>>, %arg6: memref<1x1x128xi32, #tpu.memory_space<vmem>>, %arg7: memref<1x1x1xf32, #tpu.memory_space<vmem>>, %arg8: memref<1x128xf32, #tpu.memory_space<vmem>>) attributes {dimension_semantics = [#tpu.dimension_semantics<parallel>, #tpu.dimension_semantics<arbitrary>], iteration_bounds = array<i64: 1, 1>, scalar_prefetch = 0 : i64, scratch_operands = 1 : i64, tpu.core_type = #tpu.core_type<tc>, window_params = [{transform_indices = @transform_0, window_bounds = array<i64: 32, 128>}, {transform_indices = @transform_1, window_bounds = array<i64: 128, 32>}, {transform_indices = @transform_2, window_bounds = array<i64: 128, 1>}, {transform_indices = @transform_3, window_bounds = array<i64: 32, 128>}, {transform_indices = @transform_4, window_bounds = array<i64: 1, 1, 128>}, {transform_indices = @transform_5, window_bounds = array<i64: 1, 1, 1>}]} {
    %c0 = arith.constant 0 : index
    %c0_0 = arith.constant 0 : index
    %0 = vector.load %arg2[%c0, %c0_0] : memref<32x128xf32, #tpu.memory_space<vmem>>, vector<32x128xf32>
    %c0_1 = arith.constant 0 : index
    %c0_2 = arith.constant 0 : index
    %1 = vector.load %arg3[%c0_1, %c0_2] : memref<128x32xf32, #tpu.memory_space<vmem>>, vector<128x32xf32>
    %c0_i32 = arith.constant 0 : i32
    %2 = arith.cmpi eq, %arg1, %c0_i32 : i32
    %3 = arith.extui %2 : i1 to i32
    %c0_i32_3 = arith.constant 0 : i32
    %4 = arith.cmpi ne, %3, %c0_i32_3 : i32
    scf.if %4 {
      %cst_27 = arith.constant 0x7F800000 : f32
      %47 = vector.broadcast %cst_27 : f32 to vector<1x128xf32>
      %c0_28 = arith.constant 0 : index
      %c0_29 = arith.constant 0 : index
      %48 = vector.load %arg8[%c0_28, %c0_29] : memref<1x128xf32, #tpu.memory_space<vmem>>, vector<1x128xf32>
      tpu.vector_store %arg8[%c0_28, %c0_29], %47 {strides = array<i32>} : memref<1x128xf32, #tpu.memory_space<vmem>>, vector<1x128xf32>,
    } else {
    }
    %cst = arith.constant dense<0.000000e+00> : vector<128x128xf32>
    %5 = tpu.matmul %1, %0, %cst {dimension_numbers = #tpu.dot_dimension_numbers<[1], [0], [0], [1], [0, 0, 1, 1], [], []>} : vector<128x32xf32>, vector<32x128xf32>, vector<128x128xf32> -> vector<128x128xf32>
    %c0_4 = arith.constant 0 : index
    %c0_5 = arith.constant 0 : index
    %6 = vector.load %arg4[%c0_4, %c0_5] : memref<128x1xf32, #tpu.memory_space<vmem>>, vector<128x1xf32>
    %7 = vector.broadcast %6 : vector<128x1xf32> to vector<128x128xf32>
    %8 = arith.addf %5, %7 : vector<128x128xf32>
    %cst_6 = arith.constant dense<0x7F800000> : vector<128xf32>
    %9 = vector.multi_reduction <minimumf>, %8, %cst_6 [0] : vector<128x128xf32> to vector<128xf32>
    %10 = vector.shape_cast %9 : vector<128xf32> to vector<1x128xf32>
    %11 = tpu.iota {dimensions = array<i32: 0>} : vector<128x128xi32>
    %12 = arith.sitofp %11 : vector<128x128xi32> to vector<128x128xf32>
    %13 = vector.broadcast %10 : vector<1x128xf32> to vector<128x128xf32>
    %14 = arith.cmpf oeq, %8, %13 : vector<128x128xf32>
    %cst_7 = arith.constant 1.280000e+02 : f32
    %15 = vector.broadcast %cst_7 : f32 to vector<128x128xf32>
    %16 = arith.select %14, %12, %15 : vector<128x128xi1>, vector<128x128xf32>
    %cst_8 = arith.constant dense<0x7F800000> : vector<128xf32>
    %17 = vector.multi_reduction <minimumf>, %16, %cst_8 [0] : vector<128x128xf32> to vector<128xf32>
    %18 = vector.shape_cast %17 : vector<128xf32> to vector<1x128xf32>
    %c0_9 = arith.constant 0 : index
    %c0_10 = arith.constant 0 : index
    %19 = vector.load %arg8[%c0_9, %c0_10] : memref<1x128xf32, #tpu.memory_space<vmem>>, vector<1x128xf32>
    %20 = arith.cmpf olt, %10, %19 : vector<1x128xf32>
    %21 = arith.select %20, %10, %19 : vector<1x128xi1>, vector<1x128xf32>
    %c0_11 = arith.constant 0 : index
    %c0_12 = arith.constant 0 : index
    %22 = vector.load %arg8[%c0_11, %c0_12] : memref<1x128xf32, #tpu.memory_space<vmem>>, vector<1x128xf32>
    tpu.vector_store %arg8[%c0_11, %c0_12], %21 {strides = array<i32>} : memref<1x128xf32, #tpu.memory_space<vmem>>, vector<1x128xf32>,
    %23 = arith.fptosi %18 : vector<1x128xf32> to vector<1x128xi32>
    %c128_i32 = arith.constant 128 : i32
    %24 = arith.muli %arg1, %c128_i32 : i32
    %25 = vector.broadcast %24 : i32 to vector<1x128xi32>
    %26 = arith.addi %23, %25 : vector<1x128xi32>
    %27 = vector.shape_cast %20 : vector<1x128xi1> to vector<1x1x128xi1>
    %28 = vector.shape_cast %26 : vector<1x128xi32> to vector<1x1x128xi32>
    %c0_13 = arith.constant 0 : index
    %c0_14 = arith.constant 0 : index
    %c0_15 = arith.constant 0 : index
    %29 = vector.load %arg6[%c0_13, %c0_14, %c0_15] : memref<1x1x128xi32, #tpu.memory_space<vmem>>, vector<1x1x128xi32>
    %30 = arith.select %27, %28, %29 : vector<1x1x128xi1>, vector<1x1x128xi32>
    %c0_16 = arith.constant 0 : index
    %c0_17 = arith.constant 0 : index
    %c0_18 = arith.constant 0 : index
    %31 = vector.load %arg6[%c0_16, %c0_17, %c0_18] : memref<1x1x128xi32, #tpu.memory_space<vmem>>, vector<1x1x128xi32>
    tpu.vector_store %arg6[%c0_16, %c0_17, %c0_18], %30 {strides = array<i32>} : memref<1x1x128xi32, #tpu.memory_space<vmem>>, vector<1x1x128xi32>,
    %32 = vector.broadcast %18 : vector<1x128xf32> to vector<128x128xf32>
    %33 = arith.cmpf oeq, %12, %32 : vector<128x128xf32>
    %34 = arith.extui %33 : vector<128x128xi1> to vector<128x128xi32>
    %35 = arith.sitofp %34 : vector<128x128xi32> to vector<128x128xf32>
    %cst_19 = arith.constant dense<0.000000e+00> : vector<32x128xf32>
    %36 = tpu.matmul %1, %35, %cst_19 {dimension_numbers = #tpu.dot_dimension_numbers<[0], [0], [1], [1], [0, 1, 1, 1], [], []>} : vector<128x32xf32>, vector<128x128xf32>, vector<32x128xf32> -> vector<32x128xf32>
    %c0_20 = arith.constant 0 : index
    %c0_21 = arith.constant 0 : index
    %37 = vector.load %arg5[%c0_20, %c0_21] : memref<32x128xf32, #tpu.memory_space<vmem>>, vector<32x128xf32>
    %cst_22 = arith.constant -5.000000e-01 : f32
    %38 = vector.broadcast %cst_22 : f32 to vector<32x128xf32>
    %39 = arith.mulf %38, %36 : vector<32x128xf32>
    %40 = vector.shape_cast %20 : vector<1x128xi1> to vector<1x128xi1>
    %41 = vector.broadcast %40 : vector<1x128xi1> to vector<32x128xi1>
    %42 = arith.select %41, %39, %37 : vector<32x128xi1>, vector<32x128xf32>
    %c0_23 = arith.constant 0 : index
    %c0_24 = arith.constant 0 : index
    %43 = vector.load %arg5[%c0_23, %c0_24] : memref<32x128xf32, #tpu.memory_space<vmem>>, vector<32x128xf32>
    tpu.vector_store %arg5[%c0_23, %c0_24], %42 {strides = array<i32>} : memref<32x128xf32, #tpu.memory_space<vmem>>, vector<32x128xf32>,
    %c0_i32_25 = arith.constant 0 : i32
    %44 = arith.cmpi eq, %arg1, %c0_i32_25 : i32
    %45 = arith.extui %44 : i1 to i32
    %c0_i32_26 = arith.constant 0 : i32
    %46 = arith.cmpi ne, %45, %c0_i32_26 : i32
    scf.if %46 {
      %c0_27 = arith.constant 0 : index
      %c0_28 = arith.constant 0 : index
      %47 = vector.load %arg5[%c0_27, %c0_28] : memref<32x128xf32, #tpu.memory_space<vmem>>, vector<32x128xf32>
      %48 = arith.subf %47, %0 : vector<32x128xf32>
      %49 = arith.mulf %48, %48 : vector<32x128xf32>
      %cst_29 = arith.constant dense<0.000000e+00> : vector<128xf32>
      %50 = vector.multi_reduction <add>, %49, %cst_29 [0] : vector<32x128xf32> to vector<128xf32>
      %51 = vector.shape_cast %50 : vector<128xf32> to vector<1x128xf32>
      %cst_30 = arith.constant dense<0.000000e+00> : vector<1xf32>
      %52 = vector.multi_reduction <add>, %51, %cst_30 [1] : vector<1x128xf32> to vector<1xf32>
      %53 = vector.shape_cast %52 : vector<1xf32> to vector<1x1xf32>
      %54 = vector.shape_cast %53 : vector<1x1xf32> to vector<1x1x1xf32>
      %c0_31 = arith.constant 0 : index
      %c0_32 = arith.constant 0 : index
      %c0_33 = arith.constant 0 : index
      %55 = vector.load %arg7[%c0_31, %c0_32, %c0_33] : memref<1x1x1xf32, #tpu.memory_space<vmem>>, vector<1x1x1xf32>
      tpu.vector_store %arg7[%c0_31, %c0_32, %c0_33], %54 {strides = array<i32>} : memref<1x1x1xf32, #tpu.memory_space<vmem>>, vector<1x1x1xf32>,
    } else {
    }
    return
  }
  func.func @transform_0(%arg0: i32, %arg1: i32) -> (i32, i32) {
    %c0_i32 = arith.constant 0 : i32
    %c0_i32_0 = arith.constant 0 : i32
    return %c0_i32, %arg0 : i32, i32
  }
  func.func @transform_1(%arg0: i32, %arg1: i32) -> (i32, i32) {
    %c0_i32 = arith.constant 0 : i32
    %c0_i32_0 = arith.constant 0 : i32
    return %arg1, %c0_i32 : i32, i32
  }
  func.func @transform_2(%arg0: i32, %arg1: i32) -> (i32, i32) {
    %c0_i32 = arith.constant 0 : i32
    %c0_i32_0 = arith.constant 0 : i32
    return %arg1, %c0_i32 : i32, i32
  }
  func.func @transform_3(%arg0: i32, %arg1: i32) -> (i32, i32) {
    %c0_i32 = arith.constant 0 : i32
    %c0_i32_0 = arith.constant 0 : i32
    return %c0_i32, %arg0 : i32, i32
  }
  func.func @transform_4(%arg0: i32, %arg1: i32) -> (i32, i32, i32) {
    %c0_i32 = arith.constant 0 : i32
    %c0_i32_0 = arith.constant 0 : i32
    %c0_i32_1 = arith.constant 0 : i32
    return %arg0, %c0_i32, %c0_i32_0 : i32, i32, i32
  }
  func.func @transform_5(%arg0: i32, %arg1: i32) -> (i32, i32, i32) {
    %c0_i32 = arith.constant 0 : i32
    %c0_i32_0 = arith.constant 0 : i32
    %c0_i32_1 = arith.constant 0 : i32
    return %arg0, %c0_i32, %c0_i32_0 : i32, i32, i32
  }
}

</mosaic_0001>

<llo_original>
// kernel: vq_embedding_forward.1
$region0: #{vq_embedding_forward.1}
  #allocation0 [shape = 'u32[]', space=smem, size = 0x4, offset = 0x4, fixed_abs, tag = 'smem constant byte address 0x4 - core index']
  #allocation1 [shape = 'u32[144,128]{1,0:T(1,128)}', space=vmem, size = 0x12000, scoped, tag = 'internal scratch']
  #allocation2 [shape = 'f32[1,128]{1,0:T(1,128)}', space=vmem, size = 0x200, scoped, tag = 'scratch operand']
  %s0 = inlined_call_operand.vmem [shape: f32[32,128], index: 0, kind: input, shape index: {}]
  %s1 = inlined_call_operand.vmem [shape: f32[128,32], index: 1, kind: input, shape index: {}]
  %s2 = inlined_call_operand.vmem [shape: f32[128,1], index: 2, kind: input, shape index: {}]
  %s3 = inlined_call_operand.hbm [shape: f32[32,128], index: 3, kind: output, shape index: {0}]
  %s4 = inlined_call_operand.hbm [shape: s32[1,1,128], index: 4, kind: output, shape index: {1}]
  %s5 = inlined_call_operand.hbm [shape: f32[1,1,1], index: 5, kind: output, shape index: {2}]
  %6 = xla_tuple %s3, %s4, %s5
  %s7 = sld [smem:[#allocation0]]
  $region46: #{vq_embedding_forward.1} parent=0
    _
  %s9 = ssub.s32 1, %s7
  %s10 = scalar_select 0, %s9, %s7
  $region1: #{vq_embedding_forward.1} parent=0
    #allocation3 [shape = 'u8[16384]{0}', space=vmem, size = 0x4000, scoped, tag = 'output window, operand 0, single buffered']
    #allocation4 [shape = 's32[1]{0}', space=sflag, size = 0x4, scoped, tag = 'scoped memory for vq_embedding_forward.1']
    #allocation5 [shape = 'u8[512]{0}', space=vmem, size = 0x400, scoped, tag = 'output window, operand 1, single buffered']
    #allocation6 [shape = 's32[1]{0}', space=sflag, size = 0x4, scoped, tag = 'scoped memory for vq_embedding_forward.1']
    #allocation7 [shape = 'u8[512]{0}', space=vmem, size = 0x400, scoped, tag = 'output window, operand 2, single buffered']
    %11 = vsyncpa [#allocation4], 0
    %12 = vsyncpa [#allocation6], 0
    // Predicated region
    $region2: #{vq_embedding_forward.1} parent=1 // pred_check
      _
    $region3: #{vq_embedding_forward.1} parent=1 // pred_check_branch
      %14 = sbr.rel (0) target = $region5
    $region4: #{vq_embedding_forward.1} parent=1 // pred_region
      _
    $region5: #{vq_embedding_forward.1} parent=1 // pred_fallthru
      _
    // Predicated region
    $region6: #{vq_embedding_forward.1} parent=1 // pred_check
      _
    $region7: #{vq_embedding_forward.1} parent=1 // pred_check_branch
      %16 = sbr.rel (0) target = $region9
    $region8: #{vq_embedding_forward.1} parent=1 // pred_region
      _
    $region9: #{vq_embedding_forward.1} parent=1 // pred_fallthru
      _
    // Predicated region
    $region10: #{vq_embedding_forward.1} parent=1 // pred_check
      _
    $region11: #{vq_embedding_forward.1} parent=1 // pred_check_branch
      %18 = sbr.rel (0) target = $region13
    $region12: #{vq_embedding_forward.1} parent=1 // pred_region
      _
    $region13: #{vq_embedding_forward.1} parent=1 // pred_fallthru
      _
    %v19 = vld [vmem:[%s0] sm:$0xff]
    %v20 = vld [vmem:[%s0 + $0x8] sm:$0xff]
    %v21 = vld [vmem:[%s0 + $0x10] sm:$0xff]
    %v22 = vld [vmem:[%s0 + $0x18] sm:$0xff]
    %v23 = vld [vmem:[%s1] sm:$0xff]
    %v24 = vld [vmem:[%s1 + $0x8] sm:$0xff]
    %v25 = vld [vmem:[%s1 + $0x10] sm:$0xff]
    %v26 = vld [vmem:[%s1 + $0x18] sm:$0xff]
    %v27 = vld [vmem:[%s1 + $0x20] sm:$0xff]
    %v28 = vld [vmem:[%s1 + $0x28] sm:$0xff]
    %v29 = vld [vmem:[%s1 + $0x30] sm:$0xff]
    %v30 = vld [vmem:[%s1 + $0x38] sm:$0xff]
    %v31 = vld [vmem:[%s1 + $0x40] sm:$0xff]
    %v32 = vld [vmem:[%s1 + $0x48] sm:$0xff]
    %v33 = vld [vmem:[%s1 + $0x50] sm:$0xff]
    %v34 = vld [vmem:[%s1 + $0x58] sm:$0xff]
    %v35 = vld [vmem:[%s1 + $0x60] sm:$0xff]
    %v36 = vld [vmem:[%s1 + $0x68] sm:$0xff]
    %v37 = vld [vmem:[%s1 + $0x70] sm:$0xff]
    %v38 = vld [vmem:[%s1 + $0x78] sm:$0xff]
    %p39 = scmp.eq.s32.totalorder 0, 0
    // Predicated region
    $region14: #{vq_embedding_forward.1} parent=1 // pred_check
      %p40 = pneg %p39
    $region15: #{vq_embedding_forward.1} parent=1 // pred_check_branch
      %42 = sbr.rel (%p40) target = $region17
    $region16: #{vq_embedding_forward.1} parent=1 // pred_region
      %43 = vst [vmem:[#allocation2] sm:$0x1] inf
    $region17: #{vq_embedding_forward.1} parent=1 // pred_fallthru
      _
    %v44 = vld [vmem:[%s2] sm:$0xff]
    %v45 = vld [vmem:[%s2 + $0x8] sm:$0xff]
    %v46 = vld [vmem:[%s2 + $0x10] sm:$0xff]
    %v47 = vld [vmem:[%s2 + $0x18] sm:$0xff]
    %v48 = vld [vmem:[%s2 + $0x20] sm:$0xff]
    %v49 = vld [vmem:[%s2 + $0x28] sm:$0xff]
    %v50 = vld [vmem:[%s2 + $0x30] sm:$0xff]
    %v51 = vld [vmem:[%s2 + $0x38] sm:$0xff]
    %v52 = vld [vmem:[%s2 + $0x40] sm:$0xff]
    %v53 = vld [vmem:[%s2 + $0x48] sm:$0xff]
    %v54 = vld [vmem:[%s2 + $0x50] sm:$0xff]
    %v55 = vld [vmem:[%s2 + $0x58] sm:$0xff]
    %v56 = vld [vmem:[%s2 + $0x60] sm:$0xff]
    %v57 = vld [vmem:[%s2 + $0x68] sm:$0xff]
    %v58 = vld [vmem:[%s2 + $0x70] sm:$0xff]
    %v59 = vld [vmem:[%s2 + $0x78] sm:$0xff]
    %61 = vset.pattern.permute.xlu0 0
    %62 = vperm.xlu0 %61, %v44
    %v63 = vpop.permute.xlu0 %62
    %66 = vset.pattern.permute.xlu0 0
    %67 = vperm.xlu0 %66, %v45
    %v68 = vpop.permute.xlu0 %67
    %71 = vset.pattern.permute.xlu0 0
    %72 = vperm.xlu0 %71, %v46
    %v73 = vpop.permute.xlu0 %72
    %76 = vset.pattern.permute.xlu0 0
    %77 = vperm.xlu0 %76, %v47
    %v78 = vpop.permute.xlu0 %77
    %81 = vset.pattern.permute.xlu0 0
    %82 = vperm.xlu0 %81, %v48
    %v83 = vpop.permute.xlu0 %82
    %86 = vset.pattern.permute.xlu0 0
    %87 = vperm.xlu0 %86, %v49
    %v88 = vpop.permute.xlu0 %87
    %91 = vset.pattern.permute.xlu0 0
    %92 = vperm.xlu0 %91, %v50
    %v93 = vpop.permute.xlu0 %92
    %96 = vset.pattern.permute.xlu0 0
    %97 = vperm.xlu0 %96, %v51
    %v98 = vpop.permute.xlu0 %97
    %101 = vset.pattern.permute.xlu0 0
    %102 = vperm.xlu0 %101, %v52
    %v103 = vpop.permute.xlu0 %102
    %106 = vset.pattern.permute.xlu0 0
    %107 = vperm.xlu0 %106, %v53
    %v108 = vpop.permute.xlu0 %107
    %111 = vset.pattern.permute.xlu0 0
    %112 = vperm.xlu0 %111, %v54
    %v113 = vpop.permute.xlu0 %112
    %116 = vset.pattern.permute.xlu0 0
    %117 = vperm.xlu0 %116, %v55
    %v118 = vpop.permute.xlu0 %117
    %121 = vset.pattern.permute.xlu0 0
    %122 = vperm.xlu0 %121, %v56
    %v123 = vpop.permute.xlu0 %122
    %126 = vset.pattern.permute.xlu0 0
    %127 = vperm.xlu0 %126, %v57
    %v128 = vpop.permute.xlu0 %127
    %131 = vset.pattern.permute.xlu0 0
    %132 = vperm.xlu0 %131, %v58
    %v133 = vpop.permute.xlu0 %132
    %136 = vset.pattern.permute.xlu0 0
    %137 = vperm.xlu0 %136, %v59
    %v138 = vpop.permute.xlu0 %137
    %vm140 = vcmask 261120
    %v142 = vsel %vm140, %v23, 0
    %v145 = vsel %vm140, %v24, 0
    %v148 = vsel %vm140, %v25, 0
    %v151 = vsel %vm140, %v26, 0
    %v154 = vsel %vm140, %v27, 0
    %v157 = vsel %vm140, %v28, 0
    %v160 = vsel %vm140, %v29, 0
    %v163 = vsel %vm140, %v30, 0
    %v166 = vsel %vm140, %v31, 0
    %v169 = vsel %vm140, %v32, 0
    %v172 = vsel %vm140, %v33, 0
    %v175 = vsel %vm140, %v34, 0
    %v178 = vsel %vm140, %v35, 0
    %v181 = vsel %vm140, %v36, 0
    %v184 = vsel %vm140, %v37, 0
    %v187 = vsel %vm140, %v38, 0
    %189 = vmatprep.subr.mxu0 0.0
    %190 = vmatpush1.msra.mxu0 0.0
    %191 = vmatprep.subr.mxu0 0.0
    %192 = vmatpush1.msra.mxu0 0.0
    %193 = vmatprep.subr.mxu0 0.0
    %194 = vmatpush1.msra.mxu0 0.0
    %195 = vmatprep.subr.mxu0 0.0
    %196 = vmatpush1.msra.mxu0 0.0
    %197 = vmatprep.subr.mxu0 0.0
    %198 = vmatpush1.msra.mxu0 0.0
    %199 = vmatprep.subr.mxu0 0.0
    %200 = vmatpush1.msra.mxu0 0.0
    %201 = vmatprep.subr.mxu0 0.0
    %202 = vmatpush1.msra.mxu0 0.0
    %203 = vmatprep.subr.mxu0 0.0
    %204 = vmatpush1.msra.mxu0 0.0
    %205 = vmatprep.subr.mxu0 0.0
    %206 = vmatpush1.msra.mxu0 0.0
    %207 = vmatprep.subr.mxu0 0.0
    %208 = vmatpush1.msra.mxu0 0.0
    %209 = vmatprep.subr.mxu0 0.0
    %210 = vmatpush1.msra.mxu0 0.0
    %211 = vmatprep.subr.mxu0 0.0
    %212 = vmatpush1.msra.mxu0 0.0
    %213 = vmatprep.subr.mxu0 0.0
    %214 = vmatpush1.msra.mxu0 %v22
    %215 = vmatprep.subr.mxu0 0.0
    %216 = vmatpush1.msra.mxu0 %v21
    %217 = vmatprep.subr.mxu0 0.0
    %218 = vmatpush1.msra.mxu0 %v20
    %219 = vmatprep.subr.mxu0 0.0
    %220 = vmatpush1.msra.mxu0 %v19
    %221 = vmatprep.subr.mxu0 0.0
    %222 = vmatpush2.msra.mxu0 0.0
    %223 = vmatprep.subr.mxu0 0.0
    %224 = vmatpush2.msra.mxu0 0.0
    %225 = vmatprep.subr.mxu0 0.0
    %226 = vmatpush2.msra.mxu0 0.0
    %227 = vmatprep.subr.mxu0 0.0
    %228 = vmatpush2.msra.mxu0 0.0
    %229 = vmatprep.subr.mxu0 0.0
    %230 = vmatpush2.msra.mxu0 0.0
    %231 = vmatprep.subr.mxu0 0.0
    %232 = vmatpush2.msra.mxu0 0.0
    %233 = vmatprep.subr.mxu0 0.0
    %234 = vmatpush2.msra.mxu0 0.0
    %235 = vmatprep.subr.mxu0 0.0
    %236 = vmatpush2.msra.mxu0 0.0
    %237 = vmatprep.subr.mxu0 0.0
    %238 = vmatpush2.msra.mxu0 0.0
    %239 = vmatprep.subr.mxu0 0.0
    %240 = vmatpush2.msra.mxu0 0.0
    %241 = vmatprep.subr.mxu0 0.0
    %242 = vmatpush2.msra.mxu0 0.0
    %243 = vmatprep.subr.mxu0 0.0
    %244 = vmatpush2.msra.mxu0 0.0
    %245 = vmatprep.subr.mxu0 0.0
    %246 = vmatpush2.msra.mxu0 0.0
    %247 = vmatprep.subr.mxu0 0.0
    %248 = vmatpush2.msra.mxu0 0.0
    %249 = vmatprep.subr.mxu0 0.0
    %250 = vmatpush2.msra.mxu0 0.0
    %251 = vmatprep.subr.mxu0 0.0
    %252 = vmatpush2.msra.mxu0 0.0
    %253 = vmatprep.mubr.f32.mxu0 0.0
    %254 = vmatmul.mubr.f32.gmra.mxu0 %v142
    %v255 = vpop.f32.mrf.mxu0
    %v256 = vadd.f32 %v63, %v255
    %v257 = vpop.f32.mrf.mxu0
    %258 = vmatprep.mubr.f32.mxu0 0.0
    %259 = vmatmul.mubr.f32.gmra.mxu0 %v145
    %v260 = vpop.f32.mrf.mxu0
    %v261 = vadd.f32 %v68, %v260
    %v262 = vpop.f32.mrf.mxu0
    %263 = vmatprep.mubr.f32.mxu0 0.0
    %264 = vmatmul.mubr.f32.gmra.mxu0 %v148
    %v265 = vpop.f32.mrf.mxu0
    %v266 = vadd.f32 %v73, %v265
    %v267 = vpop.f32.mrf.mxu0
    %268 = vmatprep.mubr.f32.mxu0 0.0
    %269 = vmatmul.mubr.f32.gmra.mxu0 %v151
    %v270 = vpop.f32.mrf.mxu0
    %v271 = vadd.f32 %v78, %v270
    %v272 = vpop.f32.mrf.mxu0
    %273 = vmatprep.mubr.f32.mxu0 0.0
    %274 = vmatmul.mubr.f32.gmra.mxu0 %v154
    %v275 = vpop.f32.mrf.mxu0
    %v276 = vadd.f32 %v83, %v275
    %v277 = vpop.f32.mrf.mxu0
    %278 = vmatprep.mubr.f32.mxu0 0.0
    %279 = vmatmul.mubr.f32.gmra.mxu0 %v157
    %v280 = vpop.f32.mrf.mxu0
    %v281 = vadd.f32 %v88, %v280
    %v282 = vpop.f32.mrf.mxu0
    %283 = vmatprep.mubr.f32.mxu0 0.0
    %284 = vmatmul.mubr.f32.gmra.mxu0 %v160
    %v285 = vpop.f32.mrf.mxu0
    %v286 = vadd.f32 %v93, %v285
    %v287 = vpop.f32.mrf.mxu0
    %288 = vmatprep.mubr.f32.mxu0 0.0
    %289 = vmatmul.mubr.f32.gmra.mxu0 %v163
    %v290 = vpop.f32.mrf.mxu0
    %v291 = vadd.f32 %v98, %v290
    %v292 = vpop.f32.mrf.mxu0
    %293 = vmatprep.mubr.f32.mxu0 0.0
    %294 = vmatmul.mubr.f32.gmra.mxu0 %v166
    %v295 = vpop.f32.mrf.mxu0
    %v296 = vadd.f32 %v103, %v295
    %v297 = vpop.f32.mrf.mxu0
    %298 = vmatprep.mubr.f32.mxu0 0.0
    %299 = vmatmul.mubr.f32.gmra.mxu0 %v169
    %v300 = vpop.f32.mrf.mxu0
    %v301 = vadd.f32 %v108, %v300
    %v302 = vpop.f32.mrf.mxu0
    %303 = vmatprep.mubr.f32.mxu0 0.0
    %304 = vmatmul.mubr.f32.gmra.mxu0 %v172
    %v305 = vpop.f32.mrf.mxu0
    %v306 = vadd.f32 %v113, %v305
    %v307 = vpop.f32.mrf.mxu0
    %308 = vmatprep.mubr.f32.mxu0 0.0
    %309 = vmatmul.mubr.f32.gmra.mxu0 %v175
    %v310 = vpop.f32.mrf.mxu0
    %v311 = vadd.f32 %v118, %v310
    %v312 = vpop.f32.mrf.mxu0
    %313 = vmatprep.mubr.f32.mxu0 0.0
    %314 = vmatmul.mubr.f32.gmra.mxu0 %v178
    %v315 = vpop.f32.mrf.mxu0
    %v316 = vadd.f32 %v123, %v315
    %v317 = vpop.f32.mrf.mxu0
    %318 = vmatprep.mubr.f32.mxu0 0.0
    %319 = vmatmul.mubr.f32.gmra.mxu0 %v181
    %v320 = vpop.f32.mrf.mxu0
    %v321 = vadd.f32 %v128, %v320
    %v322 = vpop.f32.mrf.mxu0
    %323 = vmatprep.mubr.f32.mxu0 0.0
    %324 = vmatmul.mubr.f32.gmra.mxu0 %v184
    %v325 = vpop.f32.mrf.mxu0
    %v326 = vadd.f32 %v133, %v325
    %v327 = vpop.f32.mrf.mxu0
    %328 = vmatprep.mubr.f32.mxu0 0.0
    %329 = vmatmul.mubr.f32.gmra.mxu0 %v187
    %v330 = vpop.f32.mrf.mxu0
    %v331 = vadd.f32 %v138, %v330
    %v332 = vpop.f32.mrf.mxu0
    %333 = vdwg.mxu0
    %v334 = vmin.f32 %v256, %v276
    %v335 = vmin.f32 %v261, %v281
    %v336 = vmin.f32 %v266, %v286
    %v337 = vmin.f32 %v271, %v291
    %v338 = vmin.f32 %v334, %v296
    %v339 = vmin.f32 %v335, %v301
    %v340 = vmin.f32 %v336, %v306
    %v341 = vmin.f32 %v337, %v311
    %v342 = vmin.f32 %v338, %v316
    %v343 = vmin.f32 %v339, %v321
    %v344 = vmin.f32 %v340, %v326
    %v345 = vmin.f32 %v341, %v331
    %v346 = vmin.f32 %v342, %v343
    %v347 = vmin.f32 %v344, %v345
    %v348 = vmin.f32 %v346, %v347
    %v349 = vrot.slane %v348, 4
    %v350 = vmin.f32 %v348, %v349
    %v351 = vrot.slane %v350, 2
    %v352 = vmin.f32 %v350, %v351
    %v353 = vrot.slane %v352, 1
    %v354 = vmin.f32 %v352, %v353
    %v355 = vlaneseq
    %v356 = vshrl.u32 %v355, 7
    %v357 = vadd.s32 %v356, 8
    %v358 = vadd.s32 %v356, 16
    %v359 = vadd.s32 %v356, 24
    %v360 = vadd.s32 %v356, 32
    %v361 = vadd.s32 %v356, 40
    %v362 = vadd.s32 %v356, 48
    %v363 = vadd.s32 %v356, 56
    %v364 = vadd.s32 %v356, 64
    %v365 = vadd.s32 %v356, 72
    %v366 = vadd.s32 %v356, 80
    %v367 = vadd.s32 %v356, 88
    %v368 = vadd.s32 %v356, 96
    %v369 = vadd.s32 %v356, 104
    %v370 = vadd.s32 %v356, 112
    %v371 = vadd.s32 %v356, 120
    %v372 = vcvt.s32.f32 %v356
    %v373 = vcvt.s32.f32 %v357
    %v374 = vcvt.s32.f32 %v358
    %v375 = vcvt.s32.f32 %v359
    %v376 = vcvt.s32.f32 %v360
    %v377 = vcvt.s32.f32 %v361
    %v378 = vcvt.s32.f32 %v362
    %v379 = vcvt.s32.f32 %v363
    %v380 = vcvt.s32.f32 %v364
    %v381 = vcvt.s32.f32 %v365
    %v382 = vcvt.s32.f32 %v366
    %v383 = vcvt.s32.f32 %v367
    %v384 = vcvt.s32.f32 %v368
    %v385 = vcvt.s32.f32 %v369
    %v386 = vcvt.s32.f32 %v370
    %v387 = vcvt.s32.f32 %v371
    %vm388 = vcmp.eq.f32.partialorder %v256, %v354
    %vm389 = vcmp.eq.f32.partialorder %v261, %v354
    %vm390 = vcmp.eq.f32.partialorder %v266, %v354
    %vm391 = vcmp.eq.f32.partialorder %v271, %v354
    %vm392 = vcmp.eq.f32.partialorder %v276, %v354
    %vm393 = vcmp.eq.f32.partialorder %v281, %v354
    %vm394 = vcmp.eq.f32.partialorder %v286, %v354
    %vm395 = vcmp.eq.f32.partialorder %v291, %v354
    %vm396 = vcmp.eq.f32.partialorder %v296, %v354
    %vm397 = vcmp.eq.f32.partialorder %v301, %v354
    %vm398 = vcmp.eq.f32.partialorder %v306, %v354
    %vm399 = vcmp.eq.f32.partialorder %v311, %v354
    %vm400 = vcmp.eq.f32.partialorder %v316, %v354
    %vm401 = vcmp.eq.f32.partialorder %v321, %v354
    %vm402 = vcmp.eq.f32.partialorder %v326, %v354
    %vm403 = vcmp.eq.f32.partialorder %v331, %v354
    %v404 = vsel %vm388, %v372, 128.0
    %v405 = vsel %vm389, %v373, 128.0
    %v406 = vsel %vm390, %v374, 128.0
    %v407 = vsel %vm391, %v375, 128.0
    %v408 = vsel %vm392, %v376, 128.0
    %v409 = vsel %vm393, %v377, 128.0
    %v410 = vsel %vm394, %v378, 128.0
    %v411 = vsel %vm395, %v379, 128.0
    %v412 = vsel %vm396, %v380, 128.0
    %v413 = vsel %vm397, %v381, 128.0
    %v414 = vsel %vm398, %v382, 128.0
    %v415 = vsel %vm399, %v383, 128.0
    %v416 = vsel %vm400, %v384, 128.0
    %v417 = vsel %vm401, %v385, 128.0
    %v418 = vsel %vm402, %v386, 128.0
    %v419 = vsel %vm403, %v387, 128.0
    %v420 = vmin.f32 %v404, %v408
    %v421 = vmin.f32 %v405, %v409
    %v422 = vmin.f32 %v406, %v410
    %v423 = vmin.f32 %v407, %v411
    %v424 = vmin.f32 %v420, %v412
    %v425 = vmin.f32 %v421, %v413
    %v426 = vmin.f32 %v422, %v414
    %v427 = vmin.f32 %v423, %v415
    %v428 = vmin.f32 %v424, %v416
    %v429 = vmin.f32 %v425, %v417
    %v430 = vmin.f32 %v426, %v418
    %v431 = vmin.f32 %v427, %v419
    %v432 = vmin.f32 %v428, %v429
    %v433 = vmin.f32 %v430, %v431
    %v434 = vmin.f32 %v432, %v433
    %v435 = vrot.slane %v434, 4
    %v436 = vmin.f32 %v434, %v435
    %v437 = vrot.slane %v436, 2
    %v438 = vmin.f32 %v436, %v437
    %v439 = vrot.slane %v438, 1
    %v440 = vmin.f32 %v438, %v439
    %v441 = vld [vmem:[#allocation2] sm:$0x1]
    %vm442 = vcmp.lt.f32.partialorder %v354, %v441
    %v443 = vsel %vm442, %v354, %v441
    %444 = vst [vmem:[#allocation2] sm:$0x1] %v443
    %v445 = vcvt.f32.s32.to.zero.pseudo %v440
    %s446 = smul.u32 0, 128
    %v447 = vstv %s446
    %v448 = vadd.s32 %v445, %v447
    %v449 = vld [vmem:[#allocation5] sm:$0x1]
    %v450 = vsel %vm442, %v448, %v449
    %451 = vst [vmem:[#allocation5] sm:$0x1] %v450
    %vm452 = vcmp.eq.f32.partialorder %v372, %v440
    %vm453 = vcmp.eq.f32.partialorder %v373, %v440
    %vm454 = vcmp.eq.f32.partialorder %v374, %v440
    %vm455 = vcmp.eq.f32.partialorder %v375, %v440
    %vm456 = vcmp.eq.f32.partialorder %v376, %v440
    %vm457 = vcmp.eq.f32.partialorder %v377, %v440
    %vm458 = vcmp.eq.f32.partialorder %v378, %v440
    %vm459 = vcmp.eq.f32.partialorder %v379, %v440
    %vm460 = vcmp.eq.f32.partialorder %v380, %v440
    %vm461 = vcmp.eq.f32.partialorder %v381, %v440
    %vm462 = vcmp.eq.f32.partialorder %v382, %v440
    %vm463 = vcmp.eq.f32.partialorder %v383, %v440
    %vm464 = vcmp.eq.f32.partialorder %v384, %v440
    %vm465 = vcmp.eq.f32.partialorder %v385, %v440
    %vm466 = vcmp.eq.f32.partialorder %v386, %v440
    %vm467 = vcmp.eq.f32.partialorder %v387, %v440
    %v468 = vsel %vm452, 1, 0
    %v469 = vsel %vm453, 1, 0
    %v470 = vsel %vm454, 1, 0
    %v471 = vsel %vm455, 1, 0
    %v472 = vsel %vm456, 1, 0
    %v473 = vsel %vm457, 1, 0
    %v474 = vsel %vm458, 1, 0
    %v475 = vsel %vm459, 1, 0
    %v476 = vsel %vm460, 1, 0
    %v477 = vsel %vm461, 1, 0
    %v478 = vsel %vm462, 1, 0
    %v479 = vsel %vm463, 1, 0
    %v480 = vsel %vm464, 1, 0
    %v481 = vsel %vm465, 1, 0
    %v482 = vsel %vm466, 1, 0
    %v483 = vsel %vm467, 1, 0
    %v484 = vcvt.s32.f32 %v468
    %v485 = vcvt.s32.f32 %v469
    %v486 = vcvt.s32.f32 %v470
    %v487 = vcvt.s32.f32 %v471
    %v488 = vcvt.s32.f32 %v472
    %v489 = vcvt.s32.f32 %v473
    %v490 = vcvt.s32.f32 %v474
    %v491 = vcvt.s32.f32 %v475
    %v492 = vcvt.s32.f32 %v476
    %v493 = vcvt.s32.f32 %v477
    %v494 = vcvt.s32.f32 %v478
    %v495 = vcvt.s32.f32 %v479
    %v496 = vcvt.s32.f32 %v480
    %v497 = vcvt.s32.f32 %v481
    %v498 = vcvt.s32.f32 %v482
    %v499 = vcvt.s32.f32 %v483
    %500 = vxpose.xlu0.b32.start [1/16] %v23, 128
    %501 = vxpose.xlu0.b32.cont [2/16] %v24, 128
    %502 = vxpose.xlu0.b32.cont [3/16] %v25, 128
    %503 = vxpose.xlu0.b32.cont [4/16] %v26, 128
    %504 = vxpose.xlu0.b32.cont [5/16] %v27, 128
    %505 = vxpose.xlu0.b32.cont [6/16] %v28, 128
    %506 = vxpose.xlu0.b32.cont [7/16] %v29, 128
    %507 = vxpose.xlu0.b32.cont [8/16] %v30, 128
    %508 = vxpose.xlu0.b32.cont [9/16] %v31, 128
    %509 = vxpose.xlu0.b32.cont [10/16] %v32, 128
    %510 = vxpose.xlu0.b32.cont [11/16] %v33, 128
    %511 = vxpose.xlu0.b32.cont [12/16] %v34, 128
    %512 = vxpose.xlu0.b32.cont [13/16] %v35, 128
    %513 = vxpose.xlu0.b32.cont [14/16] %v36, 128
    %514 = vxpose.xlu0.b32.cont [15/16] %v37, 128
    %515 = vxpose.xlu0.b32.end [16/16] %v38, 128
    %v516 = vpop.trf.xlu0
    %v517 = vpop.trf.xlu0
    %v518 = vpop.trf.xlu0
    %v519 = vpop.trf.xlu0
    %v520 = vpop.trf.xlu0
    %v521 = vpop.trf.xlu0
    %v522 = vpop.trf.xlu0
    %v523 = vpop.trf.xlu0
    %v524 = vpop.trf.xlu0
    %v525 = vpop.trf.xlu0
    %v526 = vpop.trf.xlu0
    %v527 = vpop.trf.xlu0
    %v528 = vpop.trf.xlu0
    %v529 = vpop.trf.xlu0
    %v530 = vpop.trf.xlu0
    %v531 = vpop.trf.xlu0
    %532 = vmatprep.subr.mxu0 0.0
    %533 = vmatpush1.msra.mxu0 %v499
    %534 = vmatprep.subr.mxu0 0.0
    %535 = vmatpush1.msra.mxu0 %v498
    %536 = vmatprep.subr.mxu0 0.0
    %537 = vmatpush1.msra.mxu0 %v497
    %538 = vmatprep.subr.mxu0 0.0
    %539 = vmatpush1.msra.mxu0 %v496
    %540 = vmatprep.subr.mxu0 0.0
    %541 = vmatpush1.msra.mxu0 %v495
    %542 = vmatprep.subr.mxu0 0.0
    %543 = vmatpush1.msra.mxu0 %v494
    %544 = vmatprep.subr.mxu0 0.0
    %545 = vmatpush1.msra.mxu0 %v493
    %546 = vmatprep.subr.mxu0 0.0
    %547 = vmatpush1.msra.mxu0 %v492
    %548 = vmatprep.subr.mxu0 0.0
    %549 = vmatpush1.msra.mxu0 %v491
    %550 = vmatprep.subr.mxu0 0.0
    %551 = vmatpush1.msra.mxu0 %v490
    %552 = vmatprep.subr.mxu0 0.0
    %553 = vmatpush1.msra.mxu0 %v489
    %554 = vmatprep.subr.mxu0 0.0
    %555 = vmatpush1.msra.mxu0 %v488
    %556 = vmatprep.subr.mxu0 0.0
    %557 = vmatpush1.msra.mxu0 %v487
    %558 = vmatprep.subr.mxu0 0.0
    %559 = vmatpush1.msra.mxu0 %v486
    %560 = vmatprep.subr.mxu0 0.0
    %561 = vmatpush1.msra.mxu0 %v485
    %562 = vmatprep.subr.mxu0 0.0
    %563 = vmatpush1.msra.mxu0 %v484
    %564 = vmatprep.subr.mxu0 0.0
    %565 = vmatpush2.msra.mxu0 0.0
    %566 = vmatprep.subr.mxu0 0.0
    %567 = vmatpush2.msra.mxu0 0.0
    %568 = vmatprep.subr.mxu0 0.0
    %569 = vmatpush2.msra.mxu0 0.0
    %570 = vmatprep.subr.mxu0 0.0
    %571 = vmatpush2.msra.mxu0 0.0
    %572 = vmatprep.subr.mxu0 0.0
    %573 = vmatpush2.msra.mxu0 0.0
    %574 = vmatprep.subr.mxu0 0.0
    %575 = vmatpush2.msra.mxu0 0.0
    %576 = vmatprep.subr.mxu0 0.0
    %577 = vmatpush2.msra.mxu0 0.0
    %578 = vmatprep.subr.mxu0 0.0
    %579 = vmatpush2.msra.mxu0 0.0
    %580 = vmatprep.subr.mxu0 0.0
    %581 = vmatpush2.msra.mxu0 0.0
    %582 = vmatprep.subr.mxu0 0.0
    %583 = vmatpush2.msra.mxu0 0.0
    %584 = vmatprep.subr.mxu0 0.0
    %585 = vmatpush2.msra.mxu0 0.0
    %586 = vmatprep.subr.mxu0 0.0
    %587 = vmatpush2.msra.mxu0 0.0
    %588 = vmatprep.subr.mxu0 0.0
    %589 = vmatpush2.msra.mxu0 0.0
    %590 = vmatprep.subr.mxu0 0.0
    %591 = vmatpush2.msra.mxu0 0.0
    %592 = vmatprep.subr.mxu0 0.0
    %593 = vmatpush2.msra.mxu0 0.0
    %594 = vmatprep.subr.mxu0 0.0
    %595 = vmatpush2.msra.mxu0 0.0
    %596 = vmatprep.mubr.f32.mxu0 0.0
    %597 = vmatmul.mubr.f32.gmra.mxu0 %v516
    %v598 = vpop.f32.mrf.mxu0
    %v599 = vadd.f32 0.0, %v598
    %v600 = vpop.f32.mrf.mxu0
    %601 = vmatprep.mubr.f32.mxu0 0.0
    %602 = vmatmul.mubr.f32.gmra.mxu0 %v517
    %v603 = vpop.f32.mrf.mxu0
    %v604 = vadd.f32 0.0, %v603
    %v605 = vpop.f32.mrf.mxu0
    %606 = vmatprep.mubr.f32.mxu0 0.0
    %607 = vmatmul.mubr.f32.gmra.mxu0 %v518
    %v608 = vpop.f32.mrf.mxu0
    %v609 = vadd.f32 0.0, %v608
    %v610 = vpop.f32.mrf.mxu0
    %611 = vmatprep.mubr.f32.mxu0 0.0
    %612 = vmatmul.mubr.f32.gmra.mxu0 %v519
    %v613 = vpop.f32.mrf.mxu0
    %v614 = vadd.f32 0.0, %v613
    %v615 = vpop.f32.mrf.mxu0
    %616 = vdwg.mxu0
    %v617 = vld [vmem:[#allocation3] sm:$0xff]
    %v618 = vld [vmem:[#allocation3 + $0x8] sm:$0xff]
    %v619 = vld [vmem:[#allocation3 + $0x10] sm:$0xff]
    %v620 = vld [vmem:[#allocation3 + $0x18] sm:$0xff]
    %v621 = vmul.f32 %v599, -0.5
    %v622 = vmul.f32 %v604, -0.5
    %v623 = vmul.f32 %v609, -0.5
    %v624 = vmul.f32 %v614, -0.5
    %v625 = vsel %vm442, 1, 0
    %v626 = vlaneseq
    %v627 = vshrl.u32 %v626, 7
    %v628 = vsub.s32 0, %v627
    %v629 = vrot.slane %v625, %v628
    %vm630 = vcmp.eq.s32.totalorder %v629, 1
    %v631 = vsel %vm630, %v621, %v617
    %v632 = vsel %vm630, %v622, %v618
    %v633 = vsel %vm630, %v623, %v619
    %v634 = vsel %vm630, %v624, %v620
    %635 = vst [vmem:[#allocation3] sm:$0xff] %v631
    %636 = vst [vmem:[#allocation3 + $0x8] sm:$0xff] %v632
    %637 = vst [vmem:[#allocation3 + $0x10] sm:$0xff] %v633
    %638 = vst [vmem:[#allocation3 + $0x18] sm:$0xff] %v634
    // Predicated region
    $region18: #{vq_embedding_forward.1} parent=1 // pred_check
      %p639 = pneg %p39
    $region19: #{vq_embedding_forward.1} parent=1 // pred_check_branch
      %641 = sbr.rel (%p639) target = $region21
    $region20: #{vq_embedding_forward.1} parent=1 // pred_region
      %v642 = vld [vmem:[#allocation3] sm:$0xff]
      %v643 = vld [vmem:[#allocation3 + $0x8] sm:$0xff]
      %v644 = vld [vmem:[#allocation3 + $0x10] sm:$0xff]
      %v645 = vld [vmem:[#allocation3 + $0x18] sm:$0xff]
      %v646 = vsub.f32 %v642, %v19
      %v647 = vsub.f32 %v643, %v20
      %v648 = vsub.f32 %v644, %v21
      %v649 = vsub.f32 %v645, %v22
      %v650 = vmul.f32 %v646, %v646
      %v651 = vmul.f32 %v647, %v647
      %v652 = vmul.f32 %v648, %v648
      %v653 = vmul.f32 %v649, %v649
      %v654 = vadd.f32 %v650, %v651
      %v655 = vadd.f32 %v654, %v652
      %v656 = vadd.f32 %v655, %v653
      %v657 = vrot.slane %v656, 4
      %v658 = vadd.f32 %v656, %v657
      %v659 = vrot.slane %v658, 2
      %v660 = vadd.f32 %v658, %v659
      %v661 = vrot.slane %v660, 1
      %v662 = vadd.f32 %v660, %v661
      %663 = vadd.xlane.f32.xlu0 %v662
      %v664 = vpop.xlane.xlu0 %663
      %vm665 = vcmask 0
      %666 = vst.msk [vmem:[#allocation7] sm:$0x1] %vm665, %v664
    $region21: #{vq_embedding_forward.1} parent=1 // pred_fallthru
      _
    // Predicated region
    $region22: #{vq_embedding_forward.1} parent=1 // pred_check
      _
    $region23: #{vq_embedding_forward.1} parent=1 // pred_check_branch
      %668 = sbr.rel (0) target = $region25
    $region24: #{vq_embedding_forward.1} parent=1 // pred_region
      %s670 = ssub.s32 512, 512
      %671 = vsyncadd [#allocation4], %s670
      %s672 = sshll.u32 [#allocation3], 4
      %s673 = int_to_ptr.vmem [resolvable:$true] %s672
      %678 = dma.vmem_to_hbm [thread:$0]  %s673, 512, %s3, [#allocation4], 128, 128, 8
    $region25: #{vq_embedding_forward.1} parent=1 // pred_fallthru
      _
    // Predicated region
    $region26: #{vq_embedding_forward.1} parent=1 // pred_check
      _
    $region27: #{vq_embedding_forward.1} parent=1 // pred_check_branch
      %680 = sbr.rel (0) target = $region29
    $region28: #{vq_embedding_forward.1} parent=1 // pred_region
      %s682 = ssub.s32 16, 16
      %683 = vsyncadd [#allocation6], %s682
      %s685 = sshll.u32 [#allocation5], 4
      %s686 = int_to_ptr.vmem [resolvable:$true] %s685
      %688 = dma.vmem_to_hbm [thread:$0]  %s686, 16, %s4, [#allocation6]
    $region29: #{vq_embedding_forward.1} parent=1 // pred_fallthru
      _
    // Predicated region
    $region30: #{vq_embedding_forward.1} parent=1 // pred_check
      _
    $region31: #{vq_embedding_forward.1} parent=1 // pred_check_branch
      %690 = sbr.rel (0) target = $region33
    $region32: #{vq_embedding_forward.1} parent=1 // pred_region
      %s692 = ssub.s32 16, 16
      %693 = vsyncadd [#allocation6], %s692
      %s695 = sshll.u32 [#allocation7], 4
      %s696 = int_to_ptr.vmem [resolvable:$true] %s695
      %698 = dma.vmem_to_hbm [thread:$0]  %s696, 16, %s5, [#allocation6]
    $region33: #{vq_embedding_forward.1} parent=1 // pred_fallthru
      _
    // Predicated region
    $region34: #{vq_embedding_forward.1} parent=1 // pred_check
      _
    $region35: #{vq_embedding_forward.1} parent=1 // pred_check_branch
      %700 = sbr.rel (0) target = $region37
    $region36: #{vq_embedding_forward.1} parent=1 // pred_region
      %701 = dma.done [#allocation4], 512
    $region37: #{vq_embedding_forward.1} parent=1 // pred_fallthru
      _
    // Predicated region
    $region38: #{vq_embedding_forward.1} parent=1 // pred_check
      _
    $region39: #{vq_embedding_forward.1} parent=1 // pred_check_branch
      %703 = sbr.rel (0) target = $region41
    $region40: #{vq_embedding_forward.1} parent=1 // pred_region
      %704 = dma.done [#allocation6], 16
    $region41: #{vq_embedding_forward.1} parent=1 // pred_fallthru
      _
    // Predicated region
    $region42: #{vq_embedding_forward.1} parent=1 // pred_check
      _
    $region43: #{vq_embedding_forward.1} parent=1 // pred_check_branch
      %706 = sbr.rel (0) target = $region45
    $region44: #{vq_embedding_forward.1} parent=1 // pred_region
      %707 = dma.done [#allocation6], 16
    $region45: #{vq_embedding_forward.1} parent=1 // pred_fallthru
      _
    %708 = vsyncpa [#allocation4], 1
    %709 = vsyncpa [#allocation6], 1

</llo_original>
